<compile_context>
chip_gen: v5e
topology: v5e:2x2
jax: 0.10.0
libtpu: 0.0.40
codegen_flags: <defaults>
</compile_context>

<pallas_src>
import functools

import jax
import jax.numpy as jnp
from jax.experimental import pallas as pl
from jax.experimental.pallas import tpu as pltpu

_DEFAULT_MAX_TILE = 1024   # sweepable: 512 / 1024 / 2048


def _round_up(n, m):
    return ((n + m - 1) // m) * m


def _num_tensorcores_per_device():
    """Best-effort TensorCore count of the local device (v5e/v6e: 1, v7x: 2)."""
    try:
        info = pltpu.get_tpu_info()
        for attr in ("num_cores", "cores_per_chip", "num_tensorcores", "tensorcore_count"):
            n = getattr(info, attr, None)
            if n:
                return max(int(n), 1)
    except Exception:
        pass
    try:
        n = getattr(jax.devices()[0], "num_cores", None)
        if n:
            return max(int(n), 1)
    except Exception:
        pass
    return 1


def _actor_kernel(x_ref,
                  w1_ref, b1_ref,
                  w2_ref, b2_ref,
                  w3_ref, b3_ref,
                  wo_ref, bo_ref,
                  out_ref):
    """Fused 4-layer MLP forward for one batch tile (all operands resident in VMEM).

    MXU operands are bf16 with f32 accumulation; bias add / relu / tanh run in f32.
    """
    h = x_ref[...].astype(jnp.bfloat16)

    h = jnp.dot(h, w1_ref[...], preferred_element_type=jnp.float32) + b1_ref[...]
    h = jnp.maximum(h, 0.0).astype(jnp.bfloat16)

    h = jnp.dot(h, w2_ref[...], preferred_element_type=jnp.float32) + b2_ref[...]
    h = jnp.maximum(h, 0.0).astype(jnp.bfloat16)

    h = jnp.dot(h, w3_ref[...], preferred_element_type=jnp.float32) + b3_ref[...]
    h = jnp.maximum(h, 0.0).astype(jnp.bfloat16)

    o = jnp.dot(h, wo_ref[...], preferred_element_type=jnp.float32) + bo_ref[...]
    out_ref[...] = jnp.tanh(o).astype(out_ref.dtype)


def _choose_block_b(batch, max_tile=_DEFAULT_MAX_TILE):
    """Batch-tile heuristic.

    * batch <= max_tile: one tile covering the whole batch (no padding, one grid step),
      except on multi-TensorCore chips (v7x) where batches >= 256 are split into one
      balanced tile per core so the parallel batch axis can shard.
    * batch > max_tile: max_tile-row tiles; the ragged last block is handled by Pallas.
    """
    if batch <= max_tile:
        n_cores = _num_tensorcores_per_device()
        if n_cores > 1 and batch >= 256:
            return _round_up(-(-batch // n_cores), 8)
        return batch
    return max_tile


@functools.partial(jax.jit, static_argnames=("n_actions", "block_b", "core_parallel"))
def actor_forward(x, params, n_actions, block_b, core_parallel=False):
    """x: [B, n_states + n_goals] (f32 or bf16). Returns [B, n_actions] float32."""
    (w1, b1, w2, b2, w3, b3, wo, bo) = params
    B, Din = x.shape

    block_b = int(block_b)
    if block_b >= B:
        block_b = B                      # single tile == full array (always legal)
    else:
        block_b = _round_up(block_b, 8)  # sublane-aligned tile; ragged last block allowed
    grid = (pl.cdiv(B, block_b),)

    inv = lambda i: (0, 0)               # weights/biases are grid-invariant

    # TODO(synk): sweep core_parallel=True on v7x to confirm dual-TC sharding of the batch axis.
    dim_sem = (pltpu.CORE_PARALLEL,) if core_parallel else ("parallel",)

    out = pl.pallas_call(
        _actor_kernel,
        out_shape=jax.ShapeDtypeStruct((B, n_actions), jnp.float32),
        grid=grid,
        in_specs=[
            pl.BlockSpec((block_b, Din), lambda i: (i, 0)),
            pl.BlockSpec(w1.shape, inv), pl.BlockSpec(b1.shape, inv),
            pl.BlockSpec(w2.shape, inv), pl.BlockSpec(b2.shape, inv),
            pl.BlockSpec(w3.shape, inv), pl.BlockSpec(b3.shape, inv),
            pl.BlockSpec(wo.shape, inv), pl.BlockSpec(bo.shape, inv),
        ],
        out_specs=pl.BlockSpec((block_b, n_actions), lambda i: (i, 0)),
        compiler_params=pltpu.CompilerParams(
            dimension_semantics=dim_sem,
            vmem_limit_bytes=32 * 1024 * 1024,
        ),
    )(x, w1, b1, w2, b2, w3, b3, wo, bo)

    return out


def actor_apply(x, params, n_actions, block_b=None):
    """Convenience wrapper that auto-picks the batch tile.

    Note: every new (B, block_b) pair triggers a recompile; bucket B upstream for RL loops
    with highly variable batch sizes.
    """
    if block_b is None:
        block_b = _choose_block_b(x.shape[0])
    return actor_forward(x, params, n_actions, block_b)


def init_actor_params(key, n_states, n_actions, n_goals,
                      n_hidden1=256, n_hidden2=256, n_hidden3=256,
                      initial_w=0.003):
    """PyTorch nn.Linear-style init: U[-1/sqrt(fan_in), +1/sqrt(fan_in)] for weights and biases.

    Weights are stored [in_features, out_features] in bf16 (MXU operand dtype); biases stay f32.
    The output layer stays narrow (n_actions columns); no lane padding.
    """
    if isinstance(n_states, (tuple, list)):
        n_states = n_states[0]
    dims = [
        (n_states + n_goals, n_hidden1),
        (n_hidden1, n_hidden2),
        (n_hidden2, n_hidden3),
        (n_hidden3, n_actions),
    ]
    params = []
    keys = jax.random.split(key, 2 * len(dims))
    for li, (fan_in, fan_out) in enumerate(dims):
        bound = float(fan_in) ** -0.5
        w = jax.random.uniform(keys[2 * li], (fan_in, fan_out),
                               minval=-bound, maxval=bound, dtype=jnp.float32)
        b = jax.random.uniform(keys[2 * li + 1], (1, fan_out),
                               minval=-bound, maxval=bound, dtype=jnp.float32)
        params.extend([w.astype(jnp.bfloat16), b])
    return tuple(params)


def actor_forward_ref(x, params, n_actions):
    """Pure-JAX reference with the same bf16-operand / f32-accumulate precision."""
    (w1, b1, w2, b2, w3, b3, wo, bo) = params

    def lin(h, w, b):
        return jnp.dot(h.astype(jnp.bfloat16), w, preferred_element_type=jnp.float32) + b

    h = jax.nn.relu(lin(x, w1, b1))
    h = jax.nn.relu(lin(h, w2, b2))
    h = jax.nn.relu(lin(h, w3, b3))
    return jnp.tanh(lin(h, wo, bo))


if __name__ == "__main__":
    key = jax.random.PRNGKey(0)
    k_param, k_x1, k_x2, k_x3 = jax.random.split(key, 4)

    # Module-consistent small shapes: n_states=[10], n_goals=6, n_actions=4.
    n_states, n_goals, n_actions = (10,), 6, 4
    params = init_actor_params(k_param, n_states, n_actions, n_goals)
    d_in = n_states[0] + n_goals

    # 1) Tiny batch -> single full-batch tile, single grid step, no padding.
    x1 = jax.random.normal(k_x1, (8, d_in), dtype=jnp.float32)
    out1 = jax.block_until_ready(actor_apply(x1, params, n_actions))
    ref1 = actor_forward_ref(x1, params, n_actions)
    assert out1.shape == (8, n_actions), out1.shape
    assert jnp.allclose(out1, ref1, atol=2e-3, rtol=2e-3), float(jnp.max(jnp.abs(out1 - ref1)))

    # 2) Forced-small tile -> multi-step grid with a ragged last block (B=50, block_b=16).
    x2 = jax.random.normal(k_x2, (50, d_in), dtype=jnp.float32)
    out2 = jax.block_until_ready(actor_forward(x2, params, n_actions, block_b=16))
    ref2 = actor_forward_ref(x2, params, n_actions)
    assert out2.shape == (50, n_actions), out2.shape
    assert jnp.allclose(out2, ref2, atol=2e-3, rtol=2e-3), float(jnp.max(jnp.abs(out2 - ref2)))

    # 3) Auto tile selection (single 300-row tile on 1-TC chips; 2 balanced tiles on v7x).
    x3 = jax.random.normal(k_x3, (300, d_in), dtype=jnp.float32)
    out3 = jax.block_until_ready(actor_apply(x3, params, n_actions))
    ref3 = actor_forward_ref(x3, params, n_actions)
    assert out3.shape == (300, n_actions), out3.shape
    assert jnp.allclose(out3, ref3, atol=2e-3, rtol=2e-3), float(jnp.max(jnp.abs(out3 - ref3)))

    print("KERNEL_OK")
</pallas_src>

<mosaic_0001>
module attributes {stable_mosaic.version = 11 : i64} {
  func.func @_actor_kernel(%arg0: i32, %arg1: memref<8x16xf32, #tpu.memory_space<vmem>>, %arg2: memref<16x256xbf16, #tpu.memory_space<vmem>>, %arg3: memref<1x256xf32, #tpu.memory_space<vmem>>, %arg4: memref<256x256xbf16, #tpu.memory_space<vmem>>, %arg5: memref<1x256xf32, #tpu.memory_space<vmem>>, %arg6: memref<256x256xbf16, #tpu.memory_space<vmem>>, %arg7: memref<1x256xf32, #tpu.memory_space<vmem>>, %arg8: memref<256x4xbf16, #tpu.memory_space<vmem>>, %arg9: memref<1x4xf32, #tpu.memory_space<vmem>>, %arg10: memref<8x4xf32, #tpu.memory_space<vmem>>) attributes {dimension_semantics = [#tpu.dimension_semantics<parallel>], iteration_bounds = array<i64: 1>, scalar_prefetch = 0 : i64, scratch_operands = 0 : i64, tpu.core_type = #tpu.core_type<tc>, window_params = [{transform_indices = @transform_0, window_bounds = array<i64: 8, 16>}, {pipeline_mode = #tpu.pipeline_mode<synchronous>, transform_indices = @transform_1, window_bounds = array<i64: 16, 256>}, {pipeline_mode = #tpu.pipeline_mode<synchronous>, transform_indices = @transform_2, window_bounds = array<i64: 1, 256>}, {pipeline_mode = #tpu.pipeline_mode<synchronous>, transform_indices = @transform_3, window_bounds = array<i64: 256, 256>}, {pipeline_mode = #tpu.pipeline_mode<synchronous>, transform_indices = @transform_4, window_bounds = array<i64: 1, 256>}, {pipeline_mode = #tpu.pipeline_mode<synchronous>, transform_indices = @transform_5, window_bounds = array<i64: 256, 256>}, {pipeline_mode = #tpu.pipeline_mode<synchronous>, transform_indices = @transform_6, window_bounds = array<i64: 1, 256>}, {pipeline_mode = #tpu.pipeline_mode<synchronous>, transform_indices = @transform_7, window_bounds = array<i64: 256, 4>}, {pipeline_mode = #tpu.pipeline_mode<synchronous>, transform_indices = @transform_8, window_bounds = array<i64: 1, 4>}, {transform_indices = @transform_9, window_bounds = array<i64: 8, 4>}]} {
    %c0 = arith.constant 0 : index
    %c0_0 = arith.constant 0 : index
    %0 = vector.load %arg1[%c0, %c0_0] : memref<8x16xf32, #tpu.memory_space<vmem>>, vector<8x16xf32>
    %1 = arith.truncf %0 : vector<8x16xf32> to vector<8x16xbf16>
    %c0_1 = arith.constant 0 : index
    %c0_2 = arith.constant 0 : index
    %2 = vector.load %arg2[%c0_1, %c0_2] : memref<16x256xbf16, #tpu.memory_space<vmem>>, vector<16x256xbf16>
    %cst = arith.constant dense<0.000000e+00> : vector<8x256xf32>
    %3 = tpu.matmul %1, %2, %cst {dimension_numbers = #tpu.dot_dimension_numbers<[1], [0], [0], [1], [0, 0, 1, 1], [], []>} : vector<8x16xbf16>, vector<16x256xbf16>, vector<8x256xf32> -> vector<8x256xf32>
    %c0_3 = arith.constant 0 : index
    %c0_4 = arith.constant 0 : index
    %4 = vector.load %arg3[%c0_3, %c0_4] : memref<1x256xf32, #tpu.memory_space<vmem>>, vector<1x256xf32>
    %5 = vector.broadcast %4 : vector<1x256xf32> to vector<8x256xf32>
    %6 = arith.addf %3, %5 : vector<8x256xf32>
    %cst_5 = arith.constant 0.000000e+00 : f32
    %7 = vector.broadcast %cst_5 : f32 to vector<8x256xf32>
    %8 = arith.maximumf %6, %7 : vector<8x256xf32>
    %9 = arith.truncf %8 : vector<8x256xf32> to vector<8x256xbf16>
    %c0_6 = arith.constant 0 : index
    %c0_7 = arith.constant 0 : index
    %10 = vector.load %arg4[%c0_6, %c0_7] : memref<256x256xbf16, #tpu.memory_space<vmem>>, vector<256x256xbf16>
    %cst_8 = arith.constant dense<0.000000e+00> : vector<8x256xf32>
    %11 = tpu.matmul %9, %10, %cst_8 {dimension_numbers = #tpu.dot_dimension_numbers<[1], [0], [0], [1], [0, 0, 1, 1], [], []>} : vector<8x256xbf16>, vector<256x256xbf16>, vector<8x256xf32> -> vector<8x256xf32>
    %c0_9 = arith.constant 0 : index
    %c0_10 = arith.constant 0 : index
    %12 = vector.load %arg5[%c0_9, %c0_10] : memref<1x256xf32, #tpu.memory_space<vmem>>, vector<1x256xf32>
    %13 = vector.broadcast %12 : vector<1x256xf32> to vector<8x256xf32>
    %14 = arith.addf %11, %13 : vector<8x256xf32>
    %cst_11 = arith.constant 0.000000e+00 : f32
    %15 = vector.broadcast %cst_11 : f32 to vector<8x256xf32>
    %16 = arith.maximumf %14, %15 : vector<8x256xf32>
    %17 = arith.truncf %16 : vector<8x256xf32> to vector<8x256xbf16>
    %c0_12 = arith.constant 0 : index
    %c0_13 = arith.constant 0 : index
    %18 = vector.load %arg6[%c0_12, %c0_13] : memref<256x256xbf16, #tpu.memory_space<vmem>>, vector<256x256xbf16>
    %cst_14 = arith.constant dense<0.000000e+00> : vector<8x256xf32>
    %19 = tpu.matmul %17, %18, %cst_14 {dimension_numbers = #tpu.dot_dimension_numbers<[1], [0], [0], [1], [0, 0, 1, 1], [], []>} : vector<8x256xbf16>, vector<256x256xbf16>, vector<8x256xf32> -> vector<8x256xf32>
    %c0_15 = arith.constant 0 : index
    %c0_16 = arith.constant 0 : index
    %20 = vector.load %arg7[%c0_15, %c0_16] : memref<1x256xf32, #tpu.memory_space<vmem>>, vector<1x256xf32>
    %21 = vector.broadcast %20 : vector<1x256xf32> to vector<8x256xf32>
    %22 = arith.addf %19, %21 : vector<8x256xf32>
    %cst_17 = arith.constant 0.000000e+00 : f32
    %23 = vector.broadcast %cst_17 : f32 to vector<8x256xf32>
    %24 = arith.maximumf %22, %23 : vector<8x256xf32>
    %25 = arith.truncf %24 : vector<8x256xf32> to vector<8x256xbf16>
    %c0_18 = arith.constant 0 : index
    %c0_19 = arith.constant 0 : index
    %26 = vector.load %arg8[%c0_18, %c0_19] : memref<256x4xbf16, #tpu.memory_space<vmem>>, vector<256x4xbf16>
    %cst_20 = arith.constant dense<0.000000e+00> : vector<8x4xf32>
    %27 = tpu.matmul %25, %26, %cst_20 {dimension_numbers = #tpu.dot_dimension_numbers<[1], [0], [0], [1], [0, 0, 1, 1], [], []>} : vector<8x256xbf16>, vector<256x4xbf16>, vector<8x4xf32> -> vector<8x4xf32>
    %c0_21 = arith.constant 0 : index
    %c0_22 = arith.constant 0 : index
    %28 = vector.load %arg9[%c0_21, %c0_22] : memref<1x4xf32, #tpu.memory_space<vmem>>, vector<1x4xf32>
    %29 = vector.broadcast %28 : vector<1x4xf32> to vector<8x4xf32>
    %30 = arith.addf %27, %29 : vector<8x4xf32>
    %31 = math.tanh %30 : vector<8x4xf32>
    %c0_23 = arith.constant 0 : index
    %c0_24 = arith.constant 0 : index
    %32 = vector.load %arg10[%c0_23, %c0_24] : memref<8x4xf32, #tpu.memory_space<vmem>>, vector<8x4xf32>
    tpu.vector_store %arg10[%c0_23, %c0_24], %31 {strides = array<i32>} : memref<8x4xf32, #tpu.memory_space<vmem>>, vector<8x4xf32>,
    return
  }
  func.func @transform_0(%arg0: i32) -> (i32, i32) {
    %c0_i32 = arith.constant 0 : i32
    %c0_i32_0 = arith.constant 0 : i32
    return %arg0, %c0_i32 : i32, i32
  }
  func.func @transform_1(%arg0: i32) -> (i32, i32) {
    %c0_i32 = arith.constant 0 : i32
    %c0_i32_0 = arith.constant 0 : i32
    %c0_i32_1 = arith.constant 0 : i32
    return %c0_i32, %c0_i32_0 : i32, i32
  }
  func.func @transform_2(%arg0: i32) -> (i32, i32) {
    %c0_i32 = arith.constant 0 : i32
    %c0_i32_0 = arith.constant 0 : i32
    %c0_i32_1 = arith.constant 0 : i32
    return %c0_i32, %c0_i32_0 : i32, i32
  }
  func.func @transform_3(%arg0: i32) -> (i32, i32) {
    %c0_i32 = arith.constant 0 : i32
    %c0_i32_0 = arith.constant 0 : i32
    %c0_i32_1 = arith.constant 0 : i32
    return %c0_i32, %c0_i32_0 : i32, i32
  }
  func.func @transform_4(%arg0: i32) -> (i32, i32) {
    %c0_i32 = arith.constant 0 : i32
    %c0_i32_0 = arith.constant 0 : i32
    %c0_i32_1 = arith.constant 0 : i32
    return %c0_i32, %c0_i32_0 : i32, i32
  }
  func.func @transform_5(%arg0: i32) -> (i32, i32) {
    %c0_i32 = arith.constant 0 : i32
    %c0_i32_0 = arith.constant 0 : i32
    %c0_i32_1 = arith.constant 0 : i32
    return %c0_i32, %c0_i32_0 : i32, i32
  }
  func.func @transform_6(%arg0: i32) -> (i32, i32) {
    %c0_i32 = arith.constant 0 : i32
    %c0_i32_0 = arith.constant 0 : i32
    %c0_i32_1 = arith.constant 0 : i32
    return %c0_i32, %c0_i32_0 : i32, i32
  }
  func.func @transform_7(%arg0: i32) -> (i32, i32) {
    %c0_i32 = arith.constant 0 : i32
    %c0_i32_0 = arith.constant 0 : i32
    %c0_i32_1 = arith.constant 0 : i32
    return %c0_i32, %c0_i32_0 : i32, i32
  }
  func.func @transform_8(%arg0: i32) -> (i32, i32) {
    %c0_i32 = arith.constant 0 : i32
    %c0_i32_0 = arith.constant 0 : i32
    %c0_i32_1 = arith.constant 0 : i32
    return %c0_i32, %c0_i32_0 : i32, i32
  }
  func.func @transform_9(%arg0: i32) -> (i32, i32) {
    %c0_i32 = arith.constant 0 : i32
    %c0_i32_0 = arith.constant 0 : i32
    return %arg0, %c0_i32 : i32, i32
  }
}

</mosaic_0001>

<llo_original>
// kernel: actor_forward.1
$region0: #{actor_forward.1}
  #allocation0 [shape = 'u32[]', space=smem, size = 0x4, offset = 0x4, fixed_abs, tag = 'smem constant byte address 0x4 - core index']
  #allocation1 [shape = 'u32[72,128]{1,0:T(1,128)}', space=vmem, size = 0x9000, scoped, tag = 'internal scratch']
  %s0 = inlined_call_operand.vmem [shape: f32[8,16], index: 0, kind: input, shape index: {}]
  %s1 = inlined_call_operand.vmem [shape: bf16[16,256], index: 1, kind: input, shape index: {}]
  %s2 = inlined_call_operand.vmem [shape: f32[1,256], index: 2, kind: input, shape index: {}]
  %s3 = inlined_call_operand.hbm [shape: bf16[256,256], index: 3, kind: input, shape index: {}]
  %s4 = inlined_call_operand.vmem [shape: f32[1,256], index: 4, kind: input, shape index: {}]
  %s5 = inlined_call_operand.hbm [shape: bf16[256,256], index: 5, kind: input, shape index: {}]
  %s6 = inlined_call_operand.vmem [shape: f32[1,256], index: 6, kind: input, shape index: {}]
  %s7 = inlined_call_operand.vmem [shape: bf16[256,4], index: 7, kind: input, shape index: {}]
  %s8 = inlined_call_operand.vmem [shape: f32[1,4], index: 8, kind: input, shape index: {}]
  %s9 = inlined_call_operand.vmem [shape: f32[8,4], index: 9, kind: output, shape index: {}]
  %s10 = sld [smem:[#allocation0]]
  $region54: #{actor_forward.1} parent=0
    _
  %s12 = ssub.s32 1, %s10
  %s13 = scalar_select 0, %s12, %s10
  $region1: #{actor_forward.1} parent=0
    #allocation2 [shape = 'u8[131072]{0}', space=vmem, size = 0x20000, scoped, tag = 'input window, operand 3, single buffered']
    #allocation3 [shape = 's32[1]{0}', space=sflag, size = 0x4, scoped, tag = 'scoped memory for actor_forward.1']
    #allocation4 [shape = 'u8[131072]{0}', space=vmem, size = 0x20000, scoped, tag = 'input window, operand 5, single buffered']
    #allocation5 [shape = 's32[1]{0}', space=sflag, size = 0x4, scoped, tag = 'scoped memory for actor_forward.1']
    %14 = vsyncpa [#allocation3], 0
    %15 = vsyncpa [#allocation5], 0
    // Predicated region
    $region2: #{actor_forward.1} parent=1 // pred_check
      _
    $region3: #{actor_forward.1} parent=1 // pred_check_branch
      %17 = sbr.rel (0) target = $region5
    $region4: #{actor_forward.1} parent=1 // pred_region
      _
    $region5: #{actor_forward.1} parent=1 // pred_fallthru
      _
    // Predicated region
    $region6: #{actor_forward.1} parent=1 // pred_check
      _
    $region7: #{actor_forward.1} parent=1 // pred_check_branch
      %19 = sbr.rel (0) target = $region9
    $region8: #{actor_forward.1} parent=1 // pred_region
      _
    $region9: #{actor_forward.1} parent=1 // pred_fallthru
      _
    // Predicated region
    $region10: #{actor_forward.1} parent=1 // pred_check
      _
    $region11: #{actor_forward.1} parent=1 // pred_check_branch
      %21 = sbr.rel (0) target = $region13
    $region12: #{actor_forward.1} parent=1 // pred_region
      _
    $region13: #{actor_forward.1} parent=1 // pred_fallthru
      _
    // Predicated region
    $region14: #{actor_forward.1} parent=1 // pred_check
      _
    $region15: #{actor_forward.1} parent=1 // pred_check_branch
      %23 = sbr.rel (0) target = $region17
    $region16: #{actor_forward.1} parent=1 // pred_region
      %25 = vsyncadd [#allocation3], 0
      %s26 = sshll.u32 %s3, 4
      %s27 = int_to_ptr.hbm [resolvable:$true] %s26
      %s28 = sshll.u32 [#allocation2], 4
      %s29 = int_to_ptr.vmem [resolvable:$true] %s28
      %34 = dma.hbm_to_vmem [thread:$0]  %s27, 4096, %s29, [#allocation3], 128, 128, 8
    $region17: #{actor_forward.1} parent=1 // pred_fallthru
      _
    // Predicated region
    $region18: #{actor_forward.1} parent=1 // pred_check
      _
    $region19: #{actor_forward.1} parent=1 // pred_check_branch
      %36 = sbr.rel (0) target = $region21
    $region20: #{actor_forward.1} parent=1 // pred_region
      _
    $region21: #{actor_forward.1} parent=1 // pred_fallthru
      _
    // Predicated region
    $region22: #{actor_forward.1} parent=1 // pred_check
      _
    $region23: #{actor_forward.1} parent=1 // pred_check_branch
      %38 = sbr.rel (0) target = $region25
    $region24: #{actor_forward.1} parent=1 // pred_region
      %40 = vsyncadd [#allocation5], 0
      %s41 = sshll.u32 %s5, 4
      %s42 = int_to_ptr.hbm [resolvable:$true] %s41
      %s43 = sshll.u32 [#allocation4], 4
      %s44 = int_to_ptr.vmem [resolvable:$true] %s43
      %49 = dma.hbm_to_vmem [thread:$0]  %s42, 4096, %s44, [#allocation5], 128, 128, 8
    $region25: #{actor_forward.1} parent=1 // pred_fallthru
      _
    // Predicated region
    $region26: #{actor_forward.1} parent=1 // pred_check
      _
    $region27: #{actor_forward.1} parent=1 // pred_check_branch
      %51 = sbr.rel (0) target = $region29
    $region28: #{actor_forward.1} parent=1 // pred_region
      _
    $region29: #{actor_forward.1} parent=1 // pred_fallthru
      _
    // Predicated region
    $region30: #{actor_forward.1} parent=1 // pred_check
      _
    $region31: #{actor_forward.1} parent=1 // pred_check_branch
      %53 = sbr.rel (0) target = $region33
    $region32: #{actor_forward.1} parent=1 // pred_region
      _
    $region33: #{actor_forward.1} parent=1 // pred_fallthru
      _
    // Predicated region
    $region34: #{actor_forward.1} parent=1 // pred_check
      _
    $region35: #{actor_forward.1} parent=1 // pred_check_branch
      %55 = sbr.rel (0) target = $region37
    $region36: #{actor_forward.1} parent=1 // pred_region
      _
    $region37: #{actor_forward.1} parent=1 // pred_fallthru
      _
    // Predicated region
    $region38: #{actor_forward.1} parent=1 // pred_check
      _
    $region39: #{actor_forward.1} parent=1 // pred_check_branch
      %57 = sbr.rel (0) target = $region41
    $region40: #{actor_forward.1} parent=1 // pred_region
      %59 = dma.done [#allocation3], 4096
    $region41: #{actor_forward.1} parent=1 // pred_fallthru
      _
    // Predicated region
    $region42: #{actor_forward.1} parent=1 // pred_check
      _
    $region43: #{actor_forward.1} parent=1 // pred_check_branch
      %61 = sbr.rel (0) target = $region45
    $region44: #{actor_forward.1} parent=1 // pred_region
      %63 = dma.done [#allocation5], 4096
    $region45: #{actor_forward.1} parent=1 // pred_fallthru
      _
    %v65 = vld [vmem:[%s0] sm:$0xff]
    %v66 = vpack.c.bf16 %v65, %v65
    %v67 = vld [vmem:[%s1] sm:$0xff]
    %v68 = vld [vmem:[%s1 + $0x8] sm:$0xff]
    %v69 = vld [vmem:[%s2] sm:$0x3]
    %v71 = vperm.slane %v69, 0
    %v72 = vperm.slane %v69, 1
    %v77 = vunpack.c.l.b16 %v67
    %v78 = vunpack.c.h.b16 %v67
    %v79 = vunpack.c.l.b16 %v68
    %v80 = vunpack.c.h.b16 %v68
    %v81 = vpack.c.b16 %v79, %v77
    %v82 = vpack.c.b16 %v80, %v78
    %vm85 = vcmask 130048
    %v87 = vsel %vm85, %v66, 0
    %89 = vmatpush.bf16.msra.mxu0 0
    %90 = vmatpush.bf16.msra.mxu0 0
    %91 = vmatpush.bf16.msra.mxu0 0
    %92 = vmatpush.bf16.msra.mxu0 0
    %93 = vmatpush.bf16.msra.mxu0 0
    %94 = vmatpush.bf16.msra.mxu0 0
    %95 = vmatpush.bf16.msra.mxu0 0
    %96 = vmatpush.bf16.msra.mxu0 %v81
    %97 = vmatmul.bf16.gmra.mxu0 %v87
    %v98 = vpop.f32.mrf.mxu0
    %v99 = vadd.f32 %v71, %v98
    %v100 = vpop.f32.mrf.mxu0
    %101 = vdwg.mxu0
    %102 = vmatpush.bf16.msra.mxu0 0
    %103 = vmatpush.bf16.msra.mxu0 0
    %104 = vmatpush.bf16.msra.mxu0 0
    %105 = vmatpush.bf16.msra.mxu0 0
    %106 = vmatpush.bf16.msra.mxu0 0
    %107 = vmatpush.bf16.msra.mxu0 0
    %108 = vmatpush.bf16.msra.mxu0 0
    %109 = vmatpush.bf16.msra.mxu0 %v82
    %110 = vmatmul.bf16.gmra.mxu0 %v87
    %v111 = vpop.f32.mrf.mxu0
    %v112 = vadd.f32 %v72, %v111
    %v113 = vpop.f32.mrf.mxu0
    %114 = vdwg.mxu0
    %v115 = vmax.f32 %v99, 0.0
    %v116 = vmax.f32 %v112, 0.0
    %v117 = vpack.c.bf16 %v115, %v115
    %v118 = vpack.c.bf16 %v116, %v116
    %v119 = vld [vmem:[#allocation2] sm:$0xff]
    %v120 = vld [vmem:[#allocation2 + $0x8] sm:$0xff]
    %v121 = vld [vmem:[#allocation2 + $0x10] sm:$0xff]
    %v122 = vld [vmem:[#allocation2 + $0x18] sm:$0xff]
    %v123 = vld [vmem:[#allocation2 + $0x20] sm:$0xff]
    %v124 = vld [vmem:[#allocation2 + $0x28] sm:$0xff]
    %v125 = vld [vmem:[#allocation2 + $0x30] sm:$0xff]
    %v126 = vld [vmem:[#allocation2 + $0x38] sm:$0xff]
    %v127 = vld [vmem:[#allocation2 + $0x40] sm:$0xff]
    %v128 = vld [vmem:[#allocation2 + $0x48] sm:$0xff]
    %v129 = vld [vmem:[#allocation2 + $0x50] sm:$0xff]
    %v130 = vld [vmem:[#allocation2 + $0x58] sm:$0xff]
    %v131 = vld [vmem:[#allocation2 + $0x60] sm:$0xff]
    %v132 = vld [vmem:[#allocation2 + $0x68] sm:$0xff]
    %v133 = vld [vmem:[#allocation2 + $0x70] sm:$0xff]
    %v134 = vld [vmem:[#allocation2 + $0x78] sm:$0xff]
    %v135 = vld [vmem:[#allocation2 + $0x80] sm:$0xff]
    %v136 = vld [vmem:[#allocation2 + $0x88] sm:$0xff]
    %v137 = vld [vmem:[#allocation2 + $0x90] sm:$0xff]
    %v138 = vld [vmem:[#allocation2 + $0x98] sm:$0xff]
    %v139 = vld [vmem:[#allocation2 + $0xa0] sm:$0xff]
    %v140 = vld [vmem:[#allocation2 + $0xa8] sm:$0xff]
    %v141 = vld [vmem:[#allocation2 + $0xb0] sm:$0xff]
    %v142 = vld [vmem:[#allocation2 + $0xb8] sm:$0xff]
    %v143 = vld [vmem:[#allocation2 + $0xc0] sm:$0xff]
    %v144 = vld [vmem:[#allocation2 + $0xc8] sm:$0xff]
    %v145 = vld [vmem:[#allocation2 + $0xd0] sm:$0xff]
    %v146 = vld [vmem:[#allocation2 + $0xd8] sm:$0xff]
    %v147 = vld [vmem:[#allocation2 + $0xe0] sm:$0xff]
    %v148 = vld [vmem:[#allocation2 + $0xe8] sm:$0xff]
    %v149 = vld [vmem:[#allocation2 + $0xf0] sm:$0xff]
    %v150 = vld [vmem:[#allocation2 + $0xf8] sm:$0xff]
    %v151 = vld [vmem:[%s4] sm:$0x3]
    %v153 = vperm.slane %v151, 0
    %v154 = vperm.slane %v151, 1
    %v189 = vunpack.c.l.b16 %v119
    %v190 = vunpack.c.h.b16 %v119
    %v191 = vunpack.c.l.b16 %v120
    %v192 = vunpack.c.h.b16 %v120
    %v193 = vunpack.c.l.b16 %v121
    %v194 = vunpack.c.h.b16 %v121
    %v195 = vunpack.c.l.b16 %v122
    %v196 = vunpack.c.h.b16 %v122
    %v197 = vunpack.c.l.b16 %v123
    %v198 = vunpack.c.h.b16 %v123
    %v199 = vunpack.c.l.b16 %v124
    %v200 = vunpack.c.h.b16 %v124
    %v201 = vunpack.c.l.b16 %v125
    %v202 = vunpack.c.h.b16 %v125
    %v203 = vunpack.c.l.b16 %v126
    %v204 = vunpack.c.h.b16 %v126
    %v205 = vunpack.c.l.b16 %v127
    %v206 = vunpack.c.h.b16 %v127
    %v207 = vunpack.c.l.b16 %v128
    %v208 = vunpack.c.h.b16 %v128
    %v209 = vunpack.c.l.b16 %v129
    %v210 = vunpack.c.h.b16 %v129
    %v211 = vunpack.c.l.b16 %v130
    %v212 = vunpack.c.h.b16 %v130
    %v213 = vunpack.c.l.b16 %v131
    %v214 = vunpack.c.h.b16 %v131
    %v215 = vunpack.c.l.b16 %v132
    %v216 = vunpack.c.h.b16 %v132
    %v217 = vunpack.c.l.b16 %v133
    %v218 = vunpack.c.h.b16 %v133
    %v219 = vunpack.c.l.b16 %v134
    %v220 = vunpack.c.h.b16 %v134
    %v221 = vunpack.c.l.b16 %v135
    %v222 = vunpack.c.h.b16 %v135
    %v223 = vunpack.c.l.b16 %v136
    %v224 = vunpack.c.h.b16 %v136
    %v225 = vunpack.c.l.b16 %v137
    %v226 = vunpack.c.h.b16 %v137
    %v227 = vunpack.c.l.b16 %v138
    %v228 = vunpack.c.h.b16 %v138
    %v229 = vunpack.c.l.b16 %v139
    %v230 = vunpack.c.h.b16 %v139
    %v231 = vunpack.c.l.b16 %v140
    %v232 = vunpack.c.h.b16 %v140
    %v233 = vunpack.c.l.b16 %v141
    %v234 = vunpack.c.h.b16 %v141
    %v235 = vunpack.c.l.b16 %v142
    %v236 = vunpack.c.h.b16 %v142
    %v237 = vunpack.c.l.b16 %v143
    %v238 = vunpack.c.h.b16 %v143
    %v239 = vunpack.c.l.b16 %v144
    %v240 = vunpack.c.h.b16 %v144
    %v241 = vunpack.c.l.b16 %v145
    %v242 = vunpack.c.h.b16 %v145
    %v243 = vunpack.c.l.b16 %v146
    %v244 = vunpack.c.h.b16 %v146
    %v245 = vunpack.c.l.b16 %v147
    %v246 = vunpack.c.h.b16 %v147
    %v247 = vunpack.c.l.b16 %v148
    %v248 = vunpack.c.h.b16 %v148
    %v249 = vunpack.c.l.b16 %v149
    %v250 = vunpack.c.h.b16 %v149
    %v251 = vunpack.c.l.b16 %v150
    %v252 = vunpack.c.h.b16 %v150
    %v253 = vpack.c.b16 %v191, %v189
    %v254 = vpack.c.b16 %v192, %v190
    %v255 = vpack.c.b16 %v195, %v193
    %v256 = vpack.c.b16 %v196, %v194
    %v257 = vpack.c.b16 %v199, %v197
    %v258 = vpack.c.b16 %v200, %v198
    %v259 = vpack.c.b16 %v203, %v201
    %v260 = vpack.c.b16 %v204, %v202
    %v261 = vpack.c.b16 %v207, %v205
    %v262 = vpack.c.b16 %v208, %v206
    %v263 = vpack.c.b16 %v211, %v209
    %v264 = vpack.c.b16 %v212, %v210
    %v265 = vpack.c.b16 %v215, %v213
    %v266 = vpack.c.b16 %v216, %v214
    %v267 = vpack.c.b16 %v219, %v217
    %v268 = vpack.c.b16 %v220, %v218
    %v269 = vpack.c.b16 %v223, %v221
    %v270 = vpack.c.b16 %v224, %v222
    %v271 = vpack.c.b16 %v227, %v225
    %v272 = vpack.c.b16 %v228, %v226
    %v273 = vpack.c.b16 %v231, %v229
    %v274 = vpack.c.b16 %v232, %v230
    %v275 = vpack.c.b16 %v235, %v233
    %v276 = vpack.c.b16 %v236, %v234
    %v277 = vpack.c.b16 %v239, %v237
    %v278 = vpack.c.b16 %v240, %v238
    %v279 = vpack.c.b16 %v243, %v241
    %v280 = vpack.c.b16 %v244, %v242
    %v281 = vpack.c.b16 %v247, %v245
    %v282 = vpack.c.b16 %v248, %v246
    %v283 = vpack.c.b16 %v251, %v249
    %v284 = vpack.c.b16 %v252, %v250
    %317 = vmatpush.bf16.msra.mxu0 %v267
    %318 = vmatpush.bf16.msra.mxu0 %v265
    %319 = vmatpush.bf16.msra.mxu0 %v263
    %320 = vmatpush.bf16.msra.mxu0 %v261
    %321 = vmatpush.bf16.msra.mxu0 %v259
    %322 = vmatpush.bf16.msra.mxu0 %v257
    %323 = vmatpush.bf16.msra.mxu0 %v255
    %324 = vmatpush.bf16.msra.mxu0 %v253
    %325 = vmatmul.bf16.gmra.mxu0 %v117
    %v326 = vpop.f32.mrf.mxu0
    %v327 = vadd.f32 %v153, %v326
    %v328 = vpop.f32.mrf.mxu0
    %329 = vdwg.mxu0
    %330 = vmatpush.bf16.msra.mxu0 %v283
    %331 = vmatpush.bf16.msra.mxu0 %v281
    %332 = vmatpush.bf16.msra.mxu0 %v279
    %333 = vmatpush.bf16.msra.mxu0 %v277
    %334 = vmatpush.bf16.msra.mxu0 %v275
    %335 = vmatpush.bf16.msra.mxu0 %v273
    %336 = vmatpush.bf16.msra.mxu0 %v271
    %337 = vmatpush.bf16.msra.mxu0 %v269
    %338 = vmatmul.bf16.gmra.mxu0 %v118
    %v339 = vpop.f32.mrf.mxu0
    %v340 = vadd.f32 %v327, %v339
    %v341 = vpop.f32.mrf.mxu0
    %342 = vdwg.mxu0
    %343 = vmatpush.bf16.msra.mxu0 %v268
    %344 = vmatpush.bf16.msra.mxu0 %v266
    %345 = vmatpush.bf16.msra.mxu0 %v264
    %346 = vmatpush.bf16.msra.mxu0 %v262
    %347 = vmatpush.bf16.msra.mxu0 %v260
    %348 = vmatpush.bf16.msra.mxu0 %v258
    %349 = vmatpush.bf16.msra.mxu0 %v256
    %350 = vmatpush.bf16.msra.mxu0 %v254
    %351 = vmatmul.bf16.gmra.mxu0 %v117
    %v352 = vpop.f32.mrf.mxu0
    %v353 = vadd.f32 %v154, %v352
    %v354 = vpop.f32.mrf.mxu0
    %355 = vdwg.mxu0
    %356 = vmatpush.bf16.msra.mxu0 %v284
    %357 = vmatpush.bf16.msra.mxu0 %v282
    %358 = vmatpush.bf16.msra.mxu0 %v280
    %359 = vmatpush.bf16.msra.mxu0 %v278
    %360 = vmatpush.bf16.msra.mxu0 %v276
    %361 = vmatpush.bf16.msra.mxu0 %v274
    %362 = vmatpush.bf16.msra.mxu0 %v272
    %363 = vmatpush.bf16.msra.mxu0 %v270
    %364 = vmatmul.bf16.gmra.mxu0 %v118
    %v365 = vpop.f32.mrf.mxu0
    %v366 = vadd.f32 %v353, %v365
    %v367 = vpop.f32.mrf.mxu0
    %368 = vdwg.mxu0
    %v369 = vmax.f32 %v340, 0.0
    %v370 = vmax.f32 %v366, 0.0
    %v371 = vpack.c.bf16 %v369, %v369
    %v372 = vpack.c.bf16 %v370, %v370
    %v373 = vld [vmem:[#allocation4] sm:$0xff]
    %v374 = vld [vmem:[#allocation4 + $0x8] sm:$0xff]
    %v375 = vld [vmem:[#allocation4 + $0x10] sm:$0xff]
    %v376 = vld [vmem:[#allocation4 + $0x18] sm:$0xff]
    %v377 = vld [vmem:[#allocation4 + $0x20] sm:$0xff]
    %v378 = vld [vmem:[#allocation4 + $0x28] sm:$0xff]
    %v379 = vld [vmem:[#allocation4 + $0x30] sm:$0xff]
    %v380 = vld [vmem:[#allocation4 + $0x38] sm:$0xff]
    %v381 = vld [vmem:[#allocation4 + $0x40] sm:$0xff]
    %v382 = vld [vmem:[#allocation4 + $0x48] sm:$0xff]
    %v383 = vld [vmem:[#allocation4 + $0x50] sm:$0xff]
    %v384 = vld [vmem:[#allocation4 + $0x58] sm:$0xff]
    %v385 = vld [vmem:[#allocation4 + $0x60] sm:$0xff]
    %v386 = vld [vmem:[#allocation4 + $0x68] sm:$0xff]
    %v387 = vld [vmem:[#allocation4 + $0x70] sm:$0xff]
    %v388 = vld [vmem:[#allocation4 + $0x78] sm:$0xff]
    %v389 = vld [vmem:[#allocation4 + $0x80] sm:$0xff]
    %v390 = vld [vmem:[#allocation4 + $0x88] sm:$0xff]
    %v391 = vld [vmem:[#allocation4 + $0x90] sm:$0xff]
    %v392 = vld [vmem:[#allocation4 + $0x98] sm:$0xff]
    %v393 = vld [vmem:[#allocation4 + $0xa0] sm:$0xff]
    %v394 = vld [vmem:[#allocation4 + $0xa8] sm:$0xff]
    %v395 = vld [vmem:[#allocation4 + $0xb0] sm:$0xff]
    %v396 = vld [vmem:[#allocation4 + $0xb8] sm:$0xff]
    %v397 = vld [vmem:[#allocation4 + $0xc0] sm:$0xff]
    %v398 = vld [vmem:[#allocation4 + $0xc8] sm:$0xff]
    %v399 = vld [vmem:[#allocation4 + $0xd0] sm:$0xff]
    %v400 = vld [vmem:[#allocation4 + $0xd8] sm:$0xff]
    %v401 = vld [vmem:[#allocation4 + $0xe0] sm:$0xff]
    %v402 = vld [vmem:[#allocation4 + $0xe8] sm:$0xff]
    %v403 = vld [vmem:[#allocation4 + $0xf0] sm:$0xff]
    %v404 = vld [vmem:[#allocation4 + $0xf8] sm:$0xff]
    %v405 = vld [vmem:[%s6] sm:$0x3]
    %v407 = vperm.slane %v405, 0
    %v408 = vperm.slane %v405, 1
    %v443 = vunpack.c.l.b16 %v373
    %v444 = vunpack.c.h.b16 %v373
    %v445 = vunpack.c.l.b16 %v374
    %v446 = vunpack.c.h.b16 %v374
    %v447 = vunpack.c.l.b16 %v375
    %v448 = vunpack.c.h.b16 %v375
    %v449 = vunpack.c.l.b16 %v376
    %v450 = vunpack.c.h.b16 %v376
    %v451 = vunpack.c.l.b16 %v377
    %v452 = vunpack.c.h.b16 %v377
    %v453 = vunpack.c.l.b16 %v378
    %v454 = vunpack.c.h.b16 %v378
    %v455 = vunpack.c.l.b16 %v379
    %v456 = vunpack.c.h.b16 %v379
    %v457 = vunpack.c.l.b16 %v380
    %v458 = vunpack.c.h.b16 %v380
    %v459 = vunpack.c.l.b16 %v381
    %v460 = vunpack.c.h.b16 %v381
    %v461 = vunpack.c.l.b16 %v382
    %v462 = vunpack.c.h.b16 %v382
    %v463 = vunpack.c.l.b16 %v383
    %v464 = vunpack.c.h.b16 %v383
    %v465 = vunpack.c.l.b16 %v384
    %v466 = vunpack.c.h.b16 %v384
    %v467 = vunpack.c.l.b16 %v385
    %v468 = vunpack.c.h.b16 %v385
    %v469 = vunpack.c.l.b16 %v386
    %v470 = vunpack.c.h.b16 %v386
    %v471 = vunpack.c.l.b16 %v387
    %v472 = vunpack.c.h.b16 %v387
    %v473 = vunpack.c.l.b16 %v388
    %v474 = vunpack.c.h.b16 %v388
    %v475 = vunpack.c.l.b16 %v389
    %v476 = vunpack.c.h.b16 %v389
    %v477 = vunpack.c.l.b16 %v390
    %v478 = vunpack.c.h.b16 %v390
    %v479 = vunpack.c.l.b16 %v391
    %v480 = vunpack.c.h.b16 %v391
    %v481 = vunpack.c.l.b16 %v392
    %v482 = vunpack.c.h.b16 %v392
    %v483 = vunpack.c.l.b16 %v393
    %v484 = vunpack.c.h.b16 %v393
    %v485 = vunpack.c.l.b16 %v394
    %v486 = vunpack.c.h.b16 %v394
    %v487 = vunpack.c.l.b16 %v395
    %v488 = vunpack.c.h.b16 %v395
    %v489 = vunpack.c.l.b16 %v396
    %v490 = vunpack.c.h.b16 %v396
    %v491 = vunpack.c.l.b16 %v397
    %v492 = vunpack.c.h.b16 %v397
    %v493 = vunpack.c.l.b16 %v398
    %v494 = vunpack.c.h.b16 %v398
    %v495 = vunpack.c.l.b16 %v399
    %v496 = vunpack.c.h.b16 %v399
    %v497 = vunpack.c.l.b16 %v400
    %v498 = vunpack.c.h.b16 %v400
    %v499 = vunpack.c.l.b16 %v401
    %v500 = vunpack.c.h.b16 %v401
    %v501 = vunpack.c.l.b16 %v402
    %v502 = vunpack.c.h.b16 %v402
    %v503 = vunpack.c.l.b16 %v403
    %v504 = vunpack.c.h.b16 %v403
    %v505 = vunpack.c.l.b16 %v404
    %v506 = vunpack.c.h.b16 %v404
    %v507 = vpack.c.b16 %v445, %v443
    %v508 = vpack.c.b16 %v446, %v444
    %v509 = vpack.c.b16 %v449, %v447
    %v510 = vpack.c.b16 %v450, %v448
    %v511 = vpack.c.b16 %v453, %v451
    %v512 = vpack.c.b16 %v454, %v452
    %v513 = vpack.c.b16 %v457, %v455
    %v514 = vpack.c.b16 %v458, %v456
    %v515 = vpack.c.b16 %v461, %v459
    %v516 = vpack.c.b16 %v462, %v460
    %v517 = vpack.c.b16 %v465, %v463
    %v518 = vpack.c.b16 %v466, %v464
    %v519 = vpack.c.b16 %v469, %v467
    %v520 = vpack.c.b16 %v470, %v468
    %v521 = vpack.c.b16 %v473, %v471
    %v522 = vpack.c.b16 %v474, %v472
    %v523 = vpack.c.b16 %v477, %v475
    %v524 = vpack.c.b16 %v478, %v476
    %v525 = vpack.c.b16 %v481, %v479
    %v526 = vpack.c.b16 %v482, %v480
    %v527 = vpack.c.b16 %v485, %v483
    %v528 = vpack.c.b16 %v486, %v484
    %v529 = vpack.c.b16 %v489, %v487
    %v530 = vpack.c.b16 %v490, %v488
    %v531 = vpack.c.b16 %v493, %v491
    %v532 = vpack.c.b16 %v494, %v492
    %v533 = vpack.c.b16 %v497, %v495
    %v534 = vpack.c.b16 %v498, %v496
    %v535 = vpack.c.b16 %v501, %v499
    %v536 = vpack.c.b16 %v502, %v500
    %v537 = vpack.c.b16 %v505, %v503
    %v538 = vpack.c.b16 %v506, %v504
    %571 = vmatpush.bf16.msra.mxu0 %v521
    %572 = vmatpush.bf16.msra.mxu0 %v519
    %573 = vmatpush.bf16.msra.mxu0 %v517
    %574 = vmatpush.bf16.msra.mxu0 %v515
    %575 = vmatpush.bf16.msra.mxu0 %v513
    %576 = vmatpush.bf16.msra.mxu0 %v511
    %577 = vmatpush.bf16.msra.mxu0 %v509
    %578 = vmatpush.bf16.msra.mxu0 %v507
    %579 = vmatmul.bf16.gmra.mxu0 %v371
    %v580 = vpop.f32.mrf.mxu0
    %v581 = vadd.f32 %v407, %v580
    %v582 = vpop.f32.mrf.mxu0
    %583 = vdwg.mxu0
    %584 = vmatpush.bf16.msra.mxu0 %v537
    %585 = vmatpush.bf16.msra.mxu0 %v535
    %586 = vmatpush.bf16.msra.mxu0 %v533
    %587 = vmatpush.bf16.msra.mxu0 %v531
    %588 = vmatpush.bf16.msra.mxu0 %v529
    %589 = vmatpush.bf16.msra.mxu0 %v527
    %590 = vmatpush.bf16.msra.mxu0 %v525
    %591 = vmatpush.bf16.msra.mxu0 %v523
    %592 = vmatmul.bf16.gmra.mxu0 %v372
    %v593 = vpop.f32.mrf.mxu0
    %v594 = vadd.f32 %v581, %v593
    %v595 = vpop.f32.mrf.mxu0
    %596 = vdwg.mxu0
    %597 = vmatpush.bf16.msra.mxu0 %v522
    %598 = vmatpush.bf16.msra.mxu0 %v520
    %599 = vmatpush.bf16.msra.mxu0 %v518
    %600 = vmatpush.bf16.msra.mxu0 %v516
    %601 = vmatpush.bf16.msra.mxu0 %v514
    %602 = vmatpush.bf16.msra.mxu0 %v512
    %603 = vmatpush.bf16.msra.mxu0 %v510
    %604 = vmatpush.bf16.msra.mxu0 %v508
    %605 = vmatmul.bf16.gmra.mxu0 %v371
    %v606 = vpop.f32.mrf.mxu0
    %v607 = vadd.f32 %v408, %v606
    %v608 = vpop.f32.mrf.mxu0
    %609 = vdwg.mxu0
    %610 = vmatpush.bf16.msra.mxu0 %v538
    %611 = vmatpush.bf16.msra.mxu0 %v536
    %612 = vmatpush.bf16.msra.mxu0 %v534
    %613 = vmatpush.bf16.msra.mxu0 %v532
    %614 = vmatpush.bf16.msra.mxu0 %v530
    %615 = vmatpush.bf16.msra.mxu0 %v528
    %616 = vmatpush.bf16.msra.mxu0 %v526
    %617 = vmatpush.bf16.msra.mxu0 %v524
    %618 = vmatmul.bf16.gmra.mxu0 %v372
    %v619 = vpop.f32.mrf.mxu0
    %v620 = vadd.f32 %v607, %v619
    %v621 = vpop.f32.mrf.mxu0
    %622 = vdwg.mxu0
    %v623 = vmax.f32 %v594, 0.0
    %v624 = vmax.f32 %v620, 0.0
    %v625 = vpack.c.bf16 %v623, %v623
    %v626 = vpack.c.bf16 %v624, %v624
    %v627 = vld [vmem:[%s7] sm:$0xf]
    %v628 = vld [vmem:[%s7 + $0x4] sm:$0xf]
    %v629 = vld [vmem:[%s7 + $0x8] sm:$0xf]
    %v630 = vld [vmem:[%s7 + $0xc] sm:$0xf]
    %v631 = vld [vmem:[%s7 + $0x10] sm:$0xf]
    %v632 = vld [vmem:[%s7 + $0x14] sm:$0xf]
    %v633 = vld [vmem:[%s7 + $0x18] sm:$0xf]
    %v634 = vld [vmem:[%s7 + $0x1c] sm:$0xf]
    %v635 = vld [vmem:[%s7 + $0x20] sm:$0xf]
    %v636 = vld [vmem:[%s7 + $0x24] sm:$0xf]
    %v637 = vld [vmem:[%s7 + $0x28] sm:$0xf]
    %v638 = vld [vmem:[%s7 + $0x2c] sm:$0xf]
    %v639 = vld [vmem:[%s7 + $0x30] sm:$0xf]
    %v640 = vld [vmem:[%s7 + $0x34] sm:$0xf]
    %v641 = vld [vmem:[%s7 + $0x38] sm:$0xf]
    %v642 = vld [vmem:[%s7 + $0x3c] sm:$0xf]
    %v643 = vld [vmem:[%s7 + $0x40] sm:$0xf]
    %v644 = vld [vmem:[%s7 + $0x44] sm:$0xf]
    %v645 = vld [vmem:[%s7 + $0x48] sm:$0xf]
    %v646 = vld [vmem:[%s7 + $0x4c] sm:$0xf]
    %v647 = vld [vmem:[%s7 + $0x50] sm:$0xf]
    %v648 = vld [vmem:[%s7 + $0x54] sm:$0xf]
    %v649 = vld [vmem:[%s7 + $0x58] sm:$0xf]
    %v650 = vld [vmem:[%s7 + $0x5c] sm:$0xf]
    %v651 = vld [vmem:[%s7 + $0x60] sm:$0xf]
    %v652 = vld [vmem:[%s7 + $0x64] sm:$0xf]
    %v653 = vld [vmem:[%s7 + $0x68] sm:$0xf]
    %v654 = vld [vmem:[%s7 + $0x6c] sm:$0xf]
    %v655 = vld [vmem:[%s7 + $0x70] sm:$0xf]
    %v656 = vld [vmem:[%s7 + $0x74] sm:$0xf]
    %v657 = vld [vmem:[%s7 + $0x78] sm:$0xf]
    %v658 = vld [vmem:[%s7 + $0x7c] sm:$0xf]
    %v659 = vld [vmem:[%s8] sm:$0x1]
    %v661 = vperm.slane %v659, 0
    %v695 = vunpack.c.l.b16 %v627
    %v696 = vunpack.c.l.b16 %v628
    %v697 = vunpack.c.l.b16 %v629
    %v698 = vunpack.c.l.b16 %v630
    %v699 = vunpack.c.l.b16 %v631
    %v700 = vunpack.c.l.b16 %v632
    %v701 = vunpack.c.l.b16 %v633
    %v702 = vunpack.c.l.b16 %v634
    %v703 = vunpack.c.l.b16 %v635
    %v704 = vunpack.c.l.b16 %v636
    %v705 = vunpack.c.l.b16 %v637
    %v706 = vunpack.c.l.b16 %v638
    %v707 = vunpack.c.l.b16 %v639
    %v708 = vunpack.c.l.b16 %v640
    %v709 = vunpack.c.l.b16 %v641
    %v710 = vunpack.c.l.b16 %v642
    %v711 = vunpack.c.l.b16 %v643
    %v712 = vunpack.c.l.b16 %v644
    %v713 = vunpack.c.l.b16 %v645
    %v714 = vunpack.c.l.b16 %v646
    %v715 = vunpack.c.l.b16 %v647
    %v716 = vunpack.c.l.b16 %v648
    %v717 = vunpack.c.l.b16 %v649
    %v718 = vunpack.c.l.b16 %v650
    %v719 = vunpack.c.l.b16 %v651
    %v720 = vunpack.c.l.b16 %v652
    %v721 = vunpack.c.l.b16 %v653
    %v722 = vunpack.c.l.b16 %v654
    %v723 = vunpack.c.l.b16 %v655
    %v724 = vunpack.c.l.b16 %v656
    %v725 = vunpack.c.l.b16 %v657
    %v726 = vunpack.c.l.b16 %v658
    %v727 = vpack.c.b16 %v696, %v695
    %v728 = vpack.c.b16 %v698, %v697
    %v729 = vpack.c.b16 %v700, %v699
    %v730 = vpack.c.b16 %v702, %v701
    %v731 = vpack.c.b16 %v704, %v703
    %v732 = vpack.c.b16 %v706, %v705
    %v733 = vpack.c.b16 %v708, %v707
    %v734 = vpack.c.b16 %v710, %v709
    %v735 = vpack.c.b16 %v712, %v711
    %v736 = vpack.c.b16 %v714, %v713
    %v737 = vpack.c.b16 %v716, %v715
    %v738 = vpack.c.b16 %v718, %v717
    %v739 = vpack.c.b16 %v720, %v719
    %v740 = vpack.c.b16 %v722, %v721
    %v741 = vpack.c.b16 %v724, %v723
    %v742 = vpack.c.b16 %v726, %v725
    %759 = vmatpush.bf16.msra.mxu0 %v734
    %760 = vmatpush.bf16.msra.mxu0 %v733
    %761 = vmatpush.bf16.msra.mxu0 %v732
    %762 = vmatpush.bf16.msra.mxu0 %v731
    %763 = vmatpush.bf16.msra.mxu0 %v730
    %764 = vmatpush.bf16.msra.mxu0 %v729
    %765 = vmatpush.bf16.msra.mxu0 %v728
    %766 = vmatpush.bf16.msra.mxu0 %v727
    %767 = vmatmul.bf16.gmra.mxu0 %v625
    %v768 = vpop.f32.mrf.mxu0
    %v769 = vadd.f32 %v661, %v768
    %v770 = vpop.f32.mrf.mxu0
    %771 = vdwg.mxu0
    %772 = vmatpush.bf16.msra.mxu0 %v742
    %773 = vmatpush.bf16.msra.mxu0 %v741
    %774 = vmatpush.bf16.msra.mxu0 %v740
    %775 = vmatpush.bf16.msra.mxu0 %v739
    %776 = vmatpush.bf16.msra.mxu0 %v738
    %777 = vmatpush.bf16.msra.mxu0 %v737
    %778 = vmatpush.bf16.msra.mxu0 %v736
    %779 = vmatpush.bf16.msra.mxu0 %v735
    %780 = vmatmul.bf16.gmra.mxu0 %v626
    %v781 = vpop.f32.mrf.mxu0
    %v782 = vadd.f32 %v769, %v781
    %v783 = vpop.f32.mrf.mxu0
    %784 = vdwg.mxu0
    %v785 = vtanh.pop %v782
    %vm786 = vcmask 31744
    %787 = vst.msk [vmem:[%s9] sm:$0xff] %vm786, %v785
    // Predicated region
    $region46: #{actor_forward.1} parent=1 // pred_check
      _
    $region47: #{actor_forward.1} parent=1 // pred_check_branch
      %789 = sbr.rel (0) target = $region49
    $region48: #{actor_forward.1} parent=1 // pred_region
      _
    $region49: #{actor_forward.1} parent=1 // pred_fallthru
      _
    // Predicated region
    $region50: #{actor_forward.1} parent=1 // pred_check
      _
    $region51: #{actor_forward.1} parent=1 // pred_check_branch
      %791 = sbr.rel (0) target = $region53
    $region52: #{actor_forward.1} parent=1 // pred_region
      _
    $region53: #{actor_forward.1} parent=1 // pred_fallthru
      _
    %792 = vsyncpa [#allocation3], 1
    %793 = vsyncpa [#allocation5], 1

</llo_original>
